<compile_context>
chip_gen: v6e
topology: v6e:2x2x1
jax: 0.10.0
libtpu: 0.0.40
codegen_flags: <defaults>
</compile_context>

<pallas_src>
import functools
import math

import jax
import jax.numpy as jnp
from jax.experimental import pallas as pl
from jax.experimental.pallas import tpu as pltpu


def _attn_pool_kernel(kv_ref, wqk_ref, wv_ref, bv_ref, wo_ref, bo_ref, mt_ref,
                      out_ref, *, block_b, seq_k, num_heads, embed_dim):
    """One batch tile (block_b batch elements, block_b*Sk key rows) per step.

    kv_ref  : (block_b*Sk, E)  this tile's key/value input rows (native dtype)
    wqk_ref : (E, H)           fused  Wk @ (head_onehot * q_scaled)
    wv_ref  : (E, E)           V projection weight
    bv_ref  : (1, E)           V projection bias (f32)
    wo_ref  : (E, E)  bo_ref : (1, E)   output projection
    mt_ref  : (H, E)           head-membership one-hot transpose (f32)
    out_ref : (block_b, E)
    """
    Bt, Sk, E, H = block_b, seq_k, embed_dim, num_heads

    kv = kv_ref[...]                                                 # (Bt*Sk, E)

    # Scores: K projection + q scale + per-head reduce fused into one tiny
    # (E, H) weight (precomputed in the wrapper). K bias dropped (softmax shift).
    scores = jnp.dot(kv, wqk_ref[...],
                     preferred_element_type=jnp.float32)             # (Bt*Sk, H)

    # Numerically-stable, *unnormalized* softmax over keys (per batch / head).
    s3 = scores.reshape(Bt, Sk, H)
    mx = jnp.max(s3, axis=1, keepdims=True)                          # (Bt, 1, H)
    p = jnp.exp(s3 - mx)                                             # (Bt, Sk, H)
    l = jnp.sum(p, axis=1)                                           # (Bt, H)

    # V projection (f32 accumulate, bias on the V half only).
    v = jnp.dot(kv, wv_ref[...],
                preferred_element_type=jnp.float32) + bv_ref[...]    # (Bt*Sk, E)

    # Broadcast per-head probs to lanes (tiny K=H matmul), weight V, and do
    # the Sk reduction as a sublane-group reduce (XLU) — no segT matmul.
    p_full = jnp.dot(p.reshape(Bt * Sk, H), mt_ref[...],
                     preferred_element_type=jnp.float32)             # (Bt*Sk, E)
    ctx = jnp.sum((p_full * v).reshape(Bt, Sk, E), axis=1)           # (Bt, E)

    # Deferred normalization: per-(batch, head) reciprocal, broadcast to lanes.
    inv_l = pl.reciprocal(l, approx=False)                           # (Bt, H)
    inv_full = jnp.dot(inv_l, mt_ref[...],
                       preferred_element_type=jnp.float32)           # (Bt, E)
    attn = ctx * inv_full                                            # (Bt, E)

    # Output projection.
    o = jnp.dot(attn.astype(wo_ref.dtype), wo_ref[...],
                preferred_element_type=jnp.float32) + bo_ref[...]    # (Bt, E)
    out_ref[...] = o.astype(out_ref.dtype)


def flash_attention_pooling(kv, latent, wq, bq, wkv, bkv, wo, bo, *, num_heads):
    """JAX wrapper reproducing FlashAttentionPooling.forward
    (attention_mask=None, eval mode so dropout=0; causal irrelevant for Sq=1)."""
    B, Sk, E = kv.shape
    H = num_heads
    D = E // H
    scale = 1.0 / math.sqrt(D)
    in_dt = kv.dtype
    in_bytes = jnp.dtype(in_dt).itemsize

    # ---- Glue (tiny, done once in the wrapper) -----------------------------
    # Scaled latent-query projection, folded together with the K projection
    # and the per-head reduction into one (E, H) weight:
    #   wqk[e, h] = sum_d Wk[e, d] * q_scaled[d] * [d // D == h]
    q = ((latent.reshape(1, E).astype(jnp.float32) @ wq.astype(jnp.float32)
          + bq.astype(jnp.float32)) * scale).reshape(E)                    # (E,)
    head_of = jnp.arange(E) // D
    Mh = (head_of[:, None] == jnp.arange(H)[None, :]).astype(jnp.float32)  # (E, H)
    wqk = (wkv[:, :E].astype(jnp.float32) @ (Mh * q[:, None])).astype(in_dt)
    mt = Mh.T                                                               # (H, E)

    wv = wkv[:, E:].astype(in_dt)                                           # (E, E)
    bv = bkv[E:].reshape(1, E).astype(jnp.float32)
    wo_ = wo.astype(in_dt)
    bo2 = bo.reshape(1, E).astype(jnp.float32)

    # ---- VMEM-budget-driven batch tiling ------------------------------------
    try:
        vmem_cap = int(pltpu.get_tpu_info().vmem_capacity_bytes)
    except Exception:
        vmem_cap = 64 * 1024 * 1024   # conservative (v7x-sized) fallback

    # Resident, single-buffered constants.
    const_bytes = (E * H + 2 * E * E) * in_bytes + (2 * E + H * E) * 4
    # Per key-row footprint: double-buffered kv block + f32 intermediates of
    # width E (v, p_full, weighted) + narrow (H-wide) score temporaries.
    per_row = E * (2 * in_bytes + 3 * 4) + 3 * H * 4
    work_budget = max(2 * 1024 * 1024, int(0.40 * vmem_cap) - const_bytes)
    rows_budget = max(Sk, work_budget // per_row)

    blk = max(1, min(B, rows_budget // Sk))
    if blk >= B:
        block_b = B
        if B >= 16:
            # Keep >=2 grid steps so v7x's two TensorCores both get work.
            block_b = (((B + 1) // 2) + 7) // 8 * 8
    else:
        # (8,128) rule: sublane dim of a non-full block must be a multiple of 8.
        block_b = max(8, (blk // 8) * 8)
        # TODO(synk): tile Sk inside the kernel (second grid axis + online
        # softmax) for very long key sequences instead of bumping block_b to 8.

    bp = ((B + block_b - 1) // block_b) * block_b
    if bp != B:
        kv = jnp.pad(kv, ((0, bp - B), (0, 0), (0, 0)))
    kv_flat = kv.reshape(bp * Sk, E)

    est = const_bytes + block_b * Sk * per_row + 2 * block_b * E * (in_bytes + 4)
    vmem_limit = int(min(0.9 * vmem_cap, max(32 * 1024 * 1024, est * 1.3)))

    kernel = functools.partial(_attn_pool_kernel, block_b=block_b, seq_k=Sk,
                               num_heads=H, embed_dim=E)

    single = pl.Buffered(1)   # grid-invariant operands: no double buffering
    out = pl.pallas_call(
        kernel,
        out_shape=jax.ShapeDtypeStruct((bp, E), in_dt),
        grid_spec=pltpu.PrefetchScalarGridSpec(
            num_scalar_prefetch=0,
            grid=(bp // block_b,),
            in_specs=[
                pl.BlockSpec((block_b * Sk, E), lambda b: (b, 0)),        # kv rows
                pl.BlockSpec((E, H), lambda b: (0, 0), pipeline_mode=single),   # wqk
                pl.BlockSpec((E, E), lambda b: (0, 0), pipeline_mode=single),   # wv
                pl.BlockSpec((1, E), lambda b: (0, 0), pipeline_mode=single),   # bv
                pl.BlockSpec((E, E), lambda b: (0, 0), pipeline_mode=single),   # wo
                pl.BlockSpec((1, E), lambda b: (0, 0), pipeline_mode=single),   # bo
                pl.BlockSpec((H, E), lambda b: (0, 0), pipeline_mode=single),   # M.T
            ],
            out_specs=pl.BlockSpec((block_b, E), lambda b: (b, 0)),
        ),
        compiler_params=pltpu.CompilerParams(
            dimension_semantics=("parallel",),
            vmem_limit_bytes=vmem_limit),
    )(kv_flat, wqk, wv, bv, wo_, bo2, mt)

    # NOTE: for E < 128 the output last dim is lane-masked; real configs use
    # E that is a multiple of 128, which keeps stores unmasked.
    return out[:B].reshape(B, 1, E)


def reference(kv, latent, wq, bq, wkv, bkv, wo, bo, *, num_heads):
    """Pure-JAX reference of the PyTorch forward (eval, no mask)."""
    B, Sk, E = kv.shape
    D = E // num_heads
    q = (jnp.broadcast_to(latent, (B, 1, E)) @ wq + bq).reshape(B, 1, num_heads, D)
    kvp = (kv @ wkv + bkv).reshape(B, Sk, 2, num_heads, D)
    k, v = kvp[:, :, 0], kvp[:, :, 1]
    s = jnp.einsum("bqhd,bkhd->bhqk", q, k) / jnp.sqrt(jnp.float32(D))
    p = jax.nn.softmax(s, axis=-1)
    ctx = jnp.einsum("bhqk,bkhd->bqhd", p, v).reshape(B, 1, E)
    return ctx @ wo + bo


if __name__ == "__main__":
    # config: n_embd=32, n_head=4, num_heads_kv=n_head, qkv_proj_bias=True,
    #         causal=False, attn_pdrop=0.0 (eval mode)
    B, Sk, E, H = 2, 8, 32, 4

    key = jax.random.PRNGKey(0)
    ks = jax.random.split(key, 8)

    latent = jax.random.truncated_normal(ks[0], -2.0, 2.0, (1, 1, E),
                                         jnp.float32) * (E ** -0.5)
    wq = jax.random.normal(ks[1], (E, E), jnp.float32) * 0.02
    bq = jax.random.normal(ks[2], (E,), jnp.float32) * 0.02
    wkv = jax.random.normal(ks[3], (E, 2 * E), jnp.float32) * 0.02
    bkv = jax.random.normal(ks[4], (2 * E,), jnp.float32) * 0.02
    wo = jax.random.normal(ks[5], (E, E), jnp.float32) * 0.02
    bo = jax.random.normal(ks[6], (E,), jnp.float32) * 0.02

    kv_input = jax.random.normal(ks[7], (B, Sk, E), jnp.float32)

    out = flash_attention_pooling(kv_input, latent, wq, bq, wkv, bkv, wo, bo,
                                  num_heads=H)
    out = jax.block_until_ready(out)

    ref = reference(kv_input, latent, wq, bq, wkv, bkv, wo, bo, num_heads=H)
    assert out.shape == (B, 1, E), out.shape
    assert jnp.allclose(out, ref, rtol=1e-5, atol=1e-5), \
        float(jnp.max(jnp.abs(out - ref)))

    # TODO(synk): attention_mask / varlen (flash_attn_varlen_kvpacked_func)
    # path and training-time dropout are not implemented.
    print("KERNEL_OK")
</pallas_src>

<mosaic_0001>
module attributes {stable_mosaic.version = 11 : i64} {
  func.func @_attn_pool_kernel(%arg0: i32, %arg1: memref<16x32xf32, #tpu.memory_space<vmem>>, %arg2: memref<32x4xf32, #tpu.memory_space<vmem>>, %arg3: memref<32x32xf32, #tpu.memory_space<vmem>>, %arg4: memref<1x32xf32, #tpu.memory_space<vmem>>, %arg5: memref<32x32xf32, #tpu.memory_space<vmem>>, %arg6: memref<1x32xf32, #tpu.memory_space<vmem>>, %arg7: memref<4x32xf32, #tpu.memory_space<vmem>>, %arg8: memref<2x32xf32, #tpu.memory_space<vmem>>) attributes {dimension_semantics = [#tpu.dimension_semantics<parallel>], iteration_bounds = array<i64: 1>, scalar_prefetch = 0 : i64, scratch_operands = 0 : i64, tpu.core_type = #tpu.core_type<tc>, window_params = [{transform_indices = @transform_0, window_bounds = array<i64: 16, 32>}, {pipeline_mode = #tpu.pipeline_mode<synchronous>, transform_indices = @transform_1, window_bounds = array<i64: 32, 4>}, {pipeline_mode = #tpu.pipeline_mode<synchronous>, transform_indices = @transform_2, window_bounds = array<i64: 32, 32>}, {pipeline_mode = #tpu.pipeline_mode<synchronous>, transform_indices = @transform_3, window_bounds = array<i64: 1, 32>}, {pipeline_mode = #tpu.pipeline_mode<synchronous>, transform_indices = @transform_4, window_bounds = array<i64: 32, 32>}, {pipeline_mode = #tpu.pipeline_mode<synchronous>, transform_indices = @transform_5, window_bounds = array<i64: 1, 32>}, {pipeline_mode = #tpu.pipeline_mode<synchronous>, transform_indices = @transform_6, window_bounds = array<i64: 4, 32>}, {transform_indices = @transform_7, window_bounds = array<i64: 2, 32>}]} {
    %c0 = arith.constant 0 : index
    %c0_0 = arith.constant 0 : index
    %0 = vector.load %arg1[%c0, %c0_0] : memref<16x32xf32, #tpu.memory_space<vmem>>, vector<16x32xf32>
    %c0_1 = arith.constant 0 : index
    %c0_2 = arith.constant 0 : index
    %1 = vector.load %arg2[%c0_1, %c0_2] : memref<32x4xf32, #tpu.memory_space<vmem>>, vector<32x4xf32>
    %cst = arith.constant dense<0.000000e+00> : vector<16x4xf32>
    %2 = tpu.matmul %0, %1, %cst {dimension_numbers = #tpu.dot_dimension_numbers<[1], [0], [0], [1], [0, 0, 1, 1], [], []>} : vector<16x32xf32>, vector<32x4xf32>, vector<16x4xf32> -> vector<16x4xf32>
    %3 = vector.shape_cast %2 : vector<16x4xf32> to vector<2x8x4xf32>
    %cst_3 = arith.constant dense<0xFF800000> : vector<2x4xf32>
    %4 = vector.multi_reduction <maximumf>, %3, %cst_3 [1] : vector<2x8x4xf32> to vector<2x4xf32>
    %5 = vector.shape_cast %4 : vector<2x4xf32> to vector<2x1x4xf32>
    %6 = vector.broadcast %5 : vector<2x1x4xf32> to vector<2x8x4xf32>
    %7 = arith.subf %3, %6 : vector<2x8x4xf32>
    %8 = math.exp %7 : vector<2x8x4xf32>
    %cst_4 = arith.constant dense<0.000000e+00> : vector<2x4xf32>
    %9 = vector.multi_reduction <add>, %8, %cst_4 [1] : vector<2x8x4xf32> to vector<2x4xf32>
    %c0_5 = arith.constant 0 : index
    %c0_6 = arith.constant 0 : index
    %10 = vector.load %arg3[%c0_5, %c0_6] : memref<32x32xf32, #tpu.memory_space<vmem>>, vector<32x32xf32>
    %cst_7 = arith.constant dense<0.000000e+00> : vector<16x32xf32>
    %11 = tpu.matmul %0, %10, %cst_7 {dimension_numbers = #tpu.dot_dimension_numbers<[1], [0], [0], [1], [0, 0, 1, 1], [], []>} : vector<16x32xf32>, vector<32x32xf32>, vector<16x32xf32> -> vector<16x32xf32>
    %c0_8 = arith.constant 0 : index
    %c0_9 = arith.constant 0 : index
    %12 = vector.load %arg4[%c0_8, %c0_9] : memref<1x32xf32, #tpu.memory_space<vmem>>, vector<1x32xf32>
    %13 = vector.broadcast %12 : vector<1x32xf32> to vector<16x32xf32>
    %14 = arith.addf %11, %13 : vector<16x32xf32>
    %15 = vector.shape_cast %8 : vector<2x8x4xf32> to vector<16x4xf32>
    %c0_10 = arith.constant 0 : index
    %c0_11 = arith.constant 0 : index
    %16 = vector.load %arg7[%c0_10, %c0_11] : memref<4x32xf32, #tpu.memory_space<vmem>>, vector<4x32xf32>
    %cst_12 = arith.constant dense<0.000000e+00> : vector<16x32xf32>
    %17 = tpu.matmul %15, %16, %cst_12 {dimension_numbers = #tpu.dot_dimension_numbers<[1], [0], [0], [1], [0, 0, 1, 1], [], []>} : vector<16x4xf32>, vector<4x32xf32>, vector<16x32xf32> -> vector<16x32xf32>
    %18 = arith.mulf %17, %14 : vector<16x32xf32>
    %19 = vector.shape_cast %18 : vector<16x32xf32> to vector<2x8x32xf32>
    %cst_13 = arith.constant dense<0.000000e+00> : vector<2x32xf32>
    %20 = vector.multi_reduction <add>, %19, %cst_13 [1] : vector<2x8x32xf32> to vector<2x32xf32>
    %21 = tpu.reciprocal %9 : vector<2x4xf32> -> vector<2x4xf32>
    %c0_14 = arith.constant 0 : index
    %c0_15 = arith.constant 0 : index
    %22 = vector.load %arg7[%c0_14, %c0_15] : memref<4x32xf32, #tpu.memory_space<vmem>>, vector<4x32xf32>
    %cst_16 = arith.constant dense<0.000000e+00> : vector<2x32xf32>
    %23 = tpu.matmul %21, %22, %cst_16 {dimension_numbers = #tpu.dot_dimension_numbers<[1], [0], [0], [1], [0, 0, 1, 1], [], []>} : vector<2x4xf32>, vector<4x32xf32>, vector<2x32xf32> -> vector<2x32xf32>
    %24 = arith.mulf %20, %23 : vector<2x32xf32>
    %c0_17 = arith.constant 0 : index
    %c0_18 = arith.constant 0 : index
    %25 = vector.load %arg5[%c0_17, %c0_18] : memref<32x32xf32, #tpu.memory_space<vmem>>, vector<32x32xf32>
    %cst_19 = arith.constant dense<0.000000e+00> : vector<2x32xf32>
    %26 = tpu.matmul %24, %25, %cst_19 {dimension_numbers = #tpu.dot_dimension_numbers<[1], [0], [0], [1], [0, 0, 1, 1], [], []>} : vector<2x32xf32>, vector<32x32xf32>, vector<2x32xf32> -> vector<2x32xf32>
    %c0_20 = arith.constant 0 : index
    %c0_21 = arith.constant 0 : index
    %27 = vector.load %arg6[%c0_20, %c0_21] : memref<1x32xf32, #tpu.memory_space<vmem>>, vector<1x32xf32>
    %28 = vector.broadcast %27 : vector<1x32xf32> to vector<2x32xf32>
    %29 = arith.addf %26, %28 : vector<2x32xf32>
    %c0_22 = arith.constant 0 : index
    %c0_23 = arith.constant 0 : index
    %30 = vector.load %arg8[%c0_22, %c0_23] : memref<2x32xf32, #tpu.memory_space<vmem>>, vector<2x32xf32>
    tpu.vector_store %arg8[%c0_22, %c0_23], %29 {strides = array<i32>} : memref<2x32xf32, #tpu.memory_space<vmem>>, vector<2x32xf32>,
    return
  }
  func.func @transform_0(%arg0: i32) -> (i32, i32) {
    %c0_i32 = arith.constant 0 : i32
    %c0_i32_0 = arith.constant 0 : i32
    return %arg0, %c0_i32 : i32, i32
  }
  func.func @transform_1(%arg0: i32) -> (i32, i32) {
    %c0_i32 = arith.constant 0 : i32
    %c0_i32_0 = arith.constant 0 : i32
    %c0_i32_1 = arith.constant 0 : i32
    return %c0_i32, %c0_i32_0 : i32, i32
  }
  func.func @transform_2(%arg0: i32) -> (i32, i32) {
    %c0_i32 = arith.constant 0 : i32
    %c0_i32_0 = arith.constant 0 : i32
    %c0_i32_1 = arith.constant 0 : i32
    return %c0_i32, %c0_i32_0 : i32, i32
  }
  func.func @transform_3(%arg0: i32) -> (i32, i32) {
    %c0_i32 = arith.constant 0 : i32
    %c0_i32_0 = arith.constant 0 : i32
    %c0_i32_1 = arith.constant 0 : i32
    return %c0_i32, %c0_i32_0 : i32, i32
  }
  func.func @transform_4(%arg0: i32) -> (i32, i32) {
    %c0_i32 = arith.constant 0 : i32
    %c0_i32_0 = arith.constant 0 : i32
    %c0_i32_1 = arith.constant 0 : i32
    return %c0_i32, %c0_i32_0 : i32, i32
  }
  func.func @transform_5(%arg0: i32) -> (i32, i32) {
    %c0_i32 = arith.constant 0 : i32
    %c0_i32_0 = arith.constant 0 : i32
    %c0_i32_1 = arith.constant 0 : i32
    return %c0_i32, %c0_i32_0 : i32, i32
  }
  func.func @transform_6(%arg0: i32) -> (i32, i32) {
    %c0_i32 = arith.constant 0 : i32
    %c0_i32_0 = arith.constant 0 : i32
    %c0_i32_1 = arith.constant 0 : i32
    return %c0_i32, %c0_i32_0 : i32, i32
  }
  func.func @transform_7(%arg0: i32) -> (i32, i32) {
    %c0_i32 = arith.constant 0 : i32
    %c0_i32_0 = arith.constant 0 : i32
    return %arg0, %c0_i32 : i32, i32
  }
}

</mosaic_0001>

<llo_original>
// kernel: tpu_custom_call.1
$region0: #{tpu_custom_call.1}
  #allocation0 [shape = 'u32[]', space=smem, size = 0x4, offset = 0x4, fixed_abs, tag = 'smem constant byte address 0x4 - core index']
  #allocation1 [shape = 'u32[144,128]{1,0:T(1,128)}', space=vmem, size = 0x12000, scoped, tag = 'internal scratch']
  %s0 = inlined_call_operand.hbm [shape: f32[16,32], index: 0, kind: input, shape index: {}]
  %s1 = inlined_call_operand.vmem [shape: f32[32,4], index: 1, kind: input, shape index: {}]
  %s2 = inlined_call_operand.vmem [shape: f32[32,32], index: 2, kind: input, shape index: {}]
  %s3 = inlined_call_operand.vmem [shape: f32[1,32], index: 3, kind: input, shape index: {}]
  %s4 = inlined_call_operand.hbm [shape: f32[32,32], index: 4, kind: input, shape index: {}]
  %s5 = inlined_call_operand.vmem [shape: f32[1,32], index: 5, kind: input, shape index: {}]
  %s6 = inlined_call_operand.vmem [shape: f32[4,32], index: 6, kind: input, shape index: {}]
  %s7 = inlined_call_operand.hbm [shape: f32[2,32], index: 7, kind: output, shape index: {}]
  %s8 = sld [smem:[#allocation0]]
  $region46: #{tpu_custom_call.1} parent=0
    _
  %s10 = ssub.s32 1, %s8
  %s11 = scalar_select 0, %s10, %s8
  $region1: #{tpu_custom_call.1} parent=0
    #allocation2 [shape = 'u8[8192]{0}', space=vmem, size = 0x2000, scoped, tag = 'input window, operand 0, single buffered']
    #allocation3 [shape = 's32[1]{0}', space=sflag, size = 0x4, scoped, tag = 'scoped memory for tpu_custom_call.1']
    #allocation4 [shape = 's32[1]{0}', space=sflag, size = 0x4, scoped, tag = 'scoped memory for tpu_custom_call.1']
    #allocation5 [shape = 'u8[16384]{0}', space=vmem, size = 0x4000, scoped, tag = 'input window, operand 4, single buffered']
    #allocation6 [shape = 's32[1]{0}', space=sflag, size = 0x4, scoped, tag = 'scoped memory for tpu_custom_call.1']
    #allocation7 [shape = 'u8[1024]{0}', space=vmem, size = 0x400, scoped, tag = 'output window, operand 0, single buffered']
    %12 = vsyncpa [#allocation3], 0
    %13 = vsyncpa [#allocation6], 0
    %14 = vsyncpa [#allocation4], 0
    // Predicated region
    $region2: #{tpu_custom_call.1} parent=1 // pred_check
      _
    $region3: #{tpu_custom_call.1} parent=1 // pred_check_branch
      %16 = sbr.rel (0) target = $region5
    $region4: #{tpu_custom_call.1} parent=1 // pred_region
      %s18 = ssub.s32 256, 256
      %19 = vsyncadd [#allocation3], %s18
      %s20 = sshll.u32 [#allocation2], 4
      %s21 = int_to_ptr.vmem [resolvable:$true] %s20
      %26 = dma.hbm_to_vmem [thread:$0]  %s0, 256, %s21, [#allocation3], 128, 128, 8
    $region5: #{tpu_custom_call.1} parent=1 // pred_fallthru
      _
    // Predicated region
    $region6: #{tpu_custom_call.1} parent=1 // pred_check
      _
    $region7: #{tpu_custom_call.1} parent=1 // pred_check_branch
      %28 = sbr.rel (0) target = $region9
    $region8: #{tpu_custom_call.1} parent=1 // pred_region
      _
    $region9: #{tpu_custom_call.1} parent=1 // pred_fallthru
      _
    // Predicated region
    $region10: #{tpu_custom_call.1} parent=1 // pred_check
      _
    $region11: #{tpu_custom_call.1} parent=1 // pred_check_branch
      %30 = sbr.rel (0) target = $region13
    $region12: #{tpu_custom_call.1} parent=1 // pred_region
      _
    $region13: #{tpu_custom_call.1} parent=1 // pred_fallthru
      _
    // Predicated region
    $region14: #{tpu_custom_call.1} parent=1 // pred_check
      _
    $region15: #{tpu_custom_call.1} parent=1 // pred_check_branch
      %32 = sbr.rel (0) target = $region17
    $region16: #{tpu_custom_call.1} parent=1 // pred_region
      _
    $region17: #{tpu_custom_call.1} parent=1 // pred_fallthru
      _
    // Predicated region
    $region18: #{tpu_custom_call.1} parent=1 // pred_check
      _
    $region19: #{tpu_custom_call.1} parent=1 // pred_check_branch
      %34 = sbr.rel (0) target = $region21
    $region20: #{tpu_custom_call.1} parent=1 // pred_region
      %s36 = ssub.s32 512, 512
      %37 = vsyncadd [#allocation6], %s36
      %s38 = sshll.u32 [#allocation5], 4
      %s39 = int_to_ptr.vmem [resolvable:$true] %s38
      %44 = dma.hbm_to_vmem [thread:$0]  %s4, 512, %s39, [#allocation6], 128, 128, 8
    $region21: #{tpu_custom_call.1} parent=1 // pred_fallthru
      _
    // Predicated region
    $region22: #{tpu_custom_call.1} parent=1 // pred_check
      _
    $region23: #{tpu_custom_call.1} parent=1 // pred_check_branch
      %46 = sbr.rel (0) target = $region25
    $region24: #{tpu_custom_call.1} parent=1 // pred_region
      _
    $region25: #{tpu_custom_call.1} parent=1 // pred_fallthru
      _
    // Predicated region
    $region26: #{tpu_custom_call.1} parent=1 // pred_check
      _
    $region27: #{tpu_custom_call.1} parent=1 // pred_check_branch
      %48 = sbr.rel (0) target = $region29
    $region28: #{tpu_custom_call.1} parent=1 // pred_region
      _
    $region29: #{tpu_custom_call.1} parent=1 // pred_fallthru
      _
    // Predicated region
    $region30: #{tpu_custom_call.1} parent=1 // pred_check
      _
    $region31: #{tpu_custom_call.1} parent=1 // pred_check_branch
      %50 = sbr.rel (0) target = $region33
    $region32: #{tpu_custom_call.1} parent=1 // pred_region
      %51 = dma.done [#allocation3], 256
    $region33: #{tpu_custom_call.1} parent=1 // pred_fallthru
      _
    // Predicated region
    $region34: #{tpu_custom_call.1} parent=1 // pred_check
      _
    $region35: #{tpu_custom_call.1} parent=1 // pred_check_branch
      %53 = sbr.rel (0) target = $region37
    $region36: #{tpu_custom_call.1} parent=1 // pred_region
      %54 = dma.done [#allocation6], 512
    $region37: #{tpu_custom_call.1} parent=1 // pred_fallthru
      _
    %v55 = vld [vmem:[#allocation2] sm:$0xff]
    %v56 = vld [vmem:[#allocation2 + $0x8] sm:$0xff]
    %v57 = vld [vmem:[%s1] sm:$0xff]
    %v58 = vld [vmem:[%s1 + $0x8] sm:$0xff]
    %v59 = vld [vmem:[%s1 + $0x10] sm:$0xff]
    %v60 = vld [vmem:[%s1 + $0x18] sm:$0xff]
    %vm61 = vcmask 261120
    %v63 = vsel %vm61, %v55, 0
    %v66 = vsel %vm61, %v56, 0
    %68 = vmatprep.subr.mxu0 0.0
    %69 = vmatpush1.msra.mxu0 0.0
    %70 = vmatprep.subr.mxu0 0.0
    %71 = vmatpush1.msra.mxu0 0.0
    %72 = vmatprep.subr.mxu0 0.0
    %73 = vmatpush1.msra.mxu0 0.0
    %74 = vmatprep.subr.mxu0 0.0
    %75 = vmatpush1.msra.mxu0 0.0
    %76 = vmatprep.subr.mxu0 0.0
    %77 = vmatpush1.msra.mxu0 0.0
    %78 = vmatprep.subr.mxu0 0.0
    %79 = vmatpush1.msra.mxu0 0.0
    %80 = vmatprep.subr.mxu0 0.0
    %81 = vmatpush1.msra.mxu0 0.0
    %82 = vmatprep.subr.mxu0 0.0
    %83 = vmatpush1.msra.mxu0 0.0
    %84 = vmatprep.subr.mxu0 0.0
    %85 = vmatpush1.msra.mxu0 0.0
    %86 = vmatprep.subr.mxu0 0.0
    %87 = vmatpush1.msra.mxu0 0.0
    %88 = vmatprep.subr.mxu0 0.0
    %89 = vmatpush1.msra.mxu0 0.0
    %90 = vmatprep.subr.mxu0 0.0
    %91 = vmatpush1.msra.mxu0 0.0
    %92 = vmatprep.subr.mxu0 0.0
    %93 = vmatpush1.msra.mxu0 %v60
    %94 = vmatprep.subr.mxu0 0.0
    %95 = vmatpush1.msra.mxu0 %v59
    %96 = vmatprep.subr.mxu0 0.0
    %97 = vmatpush1.msra.mxu0 %v58
    %98 = vmatprep.subr.mxu0 0.0
    %99 = vmatpush1.msra.mxu0 %v57
    %100 = vmatprep.subr.mxu0 0.0
    %101 = vmatpush2.msra.mxu0 0.0
    %102 = vmatprep.subr.mxu0 0.0
    %103 = vmatpush2.msra.mxu0 0.0
    %104 = vmatprep.subr.mxu0 0.0
    %105 = vmatpush2.msra.mxu0 0.0
    %106 = vmatprep.subr.mxu0 0.0
    %107 = vmatpush2.msra.mxu0 0.0
    %108 = vmatprep.subr.mxu0 0.0
    %109 = vmatpush2.msra.mxu0 0.0
    %110 = vmatprep.subr.mxu0 0.0
    %111 = vmatpush2.msra.mxu0 0.0
    %112 = vmatprep.subr.mxu0 0.0
    %113 = vmatpush2.msra.mxu0 0.0
    %114 = vmatprep.subr.mxu0 0.0
    %115 = vmatpush2.msra.mxu0 0.0
    %116 = vmatprep.subr.mxu0 0.0
    %117 = vmatpush2.msra.mxu0 0.0
    %118 = vmatprep.subr.mxu0 0.0
    %119 = vmatpush2.msra.mxu0 0.0
    %120 = vmatprep.subr.mxu0 0.0
    %121 = vmatpush2.msra.mxu0 0.0
    %122 = vmatprep.subr.mxu0 0.0
    %123 = vmatpush2.msra.mxu0 0.0
    %124 = vmatprep.subr.mxu0 0.0
    %125 = vmatpush2.msra.mxu0 0.0
    %126 = vmatprep.subr.mxu0 0.0
    %127 = vmatpush2.msra.mxu0 0.0
    %128 = vmatprep.subr.mxu0 0.0
    %129 = vmatpush2.msra.mxu0 0.0
    %130 = vmatprep.subr.mxu0 0.0
    %131 = vmatpush2.msra.mxu0 0.0
    %132 = vmatprep.mubr.f32.mxu0 0.0
    %133 = vmatmul.mubr.f32.gmra.mxu0 %v63
    %v134 = vpop.f32.mrf.mxu0
    %v135 = vadd.f32 0.0, %v134
    %v136 = vpop.f32.mrf.mxu0
    %137 = vmatprep.mubr.f32.mxu0 0.0
    %138 = vmatmul.mubr.f32.gmra.mxu0 %v66
    %v139 = vpop.f32.mrf.mxu0
    %v140 = vadd.f32 0.0, %v139
    %v141 = vpop.f32.mrf.mxu0
    %142 = vdwg.mxu0
    %vm143 = vcmask 31744
    %v144 = vsel %vm143, %v135, -inf
    %v145 = vrot.slane %v144, 4
    %v146 = vmax.f32 %v144, %v145
    %v147 = vrot.slane %v146, 2
    %v148 = vmax.f32 %v146, %v147
    %v149 = vrot.slane %v148, 1
    %v150 = vmax.f32 %v148, %v149
    %v151 = vsel %vm143, %v140, -inf
    %v152 = vrot.slane %v151, 4
    %v153 = vmax.f32 %v151, %v152
    %v154 = vrot.slane %v153, 2
    %v155 = vmax.f32 %v153, %v154
    %v156 = vrot.slane %v155, 1
    %v157 = vmax.f32 %v155, %v156
    %v158 = vsub.f32 %v135, %v150
    %v159 = vsub.f32 %v140, %v157
    %v160 = vmul.f32 %v158, 1.442695
    %v161 = vpow.pop %v160
    %v162 = vmul.f32 %v159, 1.442695
    %v163 = vpow.pop %v162
    %v164 = vsel %vm143, %v161, 0.0
    %v165 = vrot.slane %v164, 4
    %v166 = vadd.f32 %v164, %v165
    %v167 = vrot.slane %v166, 2
    %v168 = vadd.f32 %v166, %v167
    %v169 = vrot.slane %v168, 1
    %v170 = vadd.f32 %v168, %v169
    %v171 = vsel %vm143, %v163, 0.0
    %v172 = vrot.slane %v171, 4
    %v173 = vadd.f32 %v171, %v172
    %v174 = vrot.slane %v173, 2
    %v175 = vadd.f32 %v173, %v174
    %v176 = vrot.slane %v175, 1
    %v177 = vadd.f32 %v175, %v176
    %v178 = vld [vmem:[%s2] sm:$0xff]
    %v179 = vld [vmem:[%s2 + $0x8] sm:$0xff]
    %v180 = vld [vmem:[%s2 + $0x10] sm:$0xff]
    %v181 = vld [vmem:[%s2 + $0x18] sm:$0xff]
    %v182 = vld [vmem:[%s3] sm:$0x1]
    %v184 = vlaneseq
    %v185 = vshrl.u32 %v184, 7
    %v186 = vsub.s32 0, %v185
    %v187 = vrot.slane %v182, %v186
    %189 = vmatprep.subr.mxu0 0.0
    %190 = vmatpush1.msra.mxu0 0.0
    %191 = vmatprep.subr.mxu0 0.0
    %192 = vmatpush1.msra.mxu0 0.0
    %193 = vmatprep.subr.mxu0 0.0
    %194 = vmatpush1.msra.mxu0 0.0
    %195 = vmatprep.subr.mxu0 0.0
    %196 = vmatpush1.msra.mxu0 0.0
    %197 = vmatprep.subr.mxu0 0.0
    %198 = vmatpush1.msra.mxu0 0.0
    %199 = vmatprep.subr.mxu0 0.0
    %200 = vmatpush1.msra.mxu0 0.0
    %201 = vmatprep.subr.mxu0 0.0
    %202 = vmatpush1.msra.mxu0 0.0
    %203 = vmatprep.subr.mxu0 0.0
    %204 = vmatpush1.msra.mxu0 0.0
    %205 = vmatprep.subr.mxu0 0.0
    %206 = vmatpush1.msra.mxu0 0.0
    %207 = vmatprep.subr.mxu0 0.0
    %208 = vmatpush1.msra.mxu0 0.0
    %209 = vmatprep.subr.mxu0 0.0
    %210 = vmatpush1.msra.mxu0 0.0
    %211 = vmatprep.subr.mxu0 0.0
    %212 = vmatpush1.msra.mxu0 0.0
    %213 = vmatprep.subr.mxu0 0.0
    %214 = vmatpush1.msra.mxu0 %v181
    %215 = vmatprep.subr.mxu0 0.0
    %216 = vmatpush1.msra.mxu0 %v180
    %217 = vmatprep.subr.mxu0 0.0
    %218 = vmatpush1.msra.mxu0 %v179
    %219 = vmatprep.subr.mxu0 0.0
    %220 = vmatpush1.msra.mxu0 %v178
    %221 = vmatprep.subr.mxu0 0.0
    %222 = vmatpush2.msra.mxu0 0.0
    %223 = vmatprep.subr.mxu0 0.0
    %224 = vmatpush2.msra.mxu0 0.0
    %225 = vmatprep.subr.mxu0 0.0
    %226 = vmatpush2.msra.mxu0 0.0
    %227 = vmatprep.subr.mxu0 0.0
    %228 = vmatpush2.msra.mxu0 0.0
    %229 = vmatprep.subr.mxu0 0.0
    %230 = vmatpush2.msra.mxu0 0.0
    %231 = vmatprep.subr.mxu0 0.0
    %232 = vmatpush2.msra.mxu0 0.0
    %233 = vmatprep.subr.mxu0 0.0
    %234 = vmatpush2.msra.mxu0 0.0
    %235 = vmatprep.subr.mxu0 0.0
    %236 = vmatpush2.msra.mxu0 0.0
    %237 = vmatprep.subr.mxu0 0.0
    %238 = vmatpush2.msra.mxu0 0.0
    %239 = vmatprep.subr.mxu0 0.0
    %240 = vmatpush2.msra.mxu0 0.0
    %241 = vmatprep.subr.mxu0 0.0
    %242 = vmatpush2.msra.mxu0 0.0
    %243 = vmatprep.subr.mxu0 0.0
    %244 = vmatpush2.msra.mxu0 0.0
    %245 = vmatprep.subr.mxu0 0.0
    %246 = vmatpush2.msra.mxu0 0.0
    %247 = vmatprep.subr.mxu0 0.0
    %248 = vmatpush2.msra.mxu0 0.0
    %249 = vmatprep.subr.mxu0 0.0
    %250 = vmatpush2.msra.mxu0 0.0
    %251 = vmatprep.subr.mxu0 0.0
    %252 = vmatpush2.msra.mxu0 0.0
    %253 = vmatprep.mubr.f32.mxu0 0.0
    %254 = vmatmul.mubr.f32.gmra.mxu0 %v63
    %v255 = vpop.f32.mrf.mxu0
    %v256 = vadd.f32 %v187, %v255
    %v257 = vpop.f32.mrf.mxu0
    %258 = vmatprep.mubr.f32.mxu0 0.0
    %259 = vmatmul.mubr.f32.gmra.mxu0 %v66
    %v260 = vpop.f32.mrf.mxu0
    %v261 = vadd.f32 %v187, %v260
    %v262 = vpop.f32.mrf.mxu0
    %263 = vdwg.mxu0
    %v264 = vld [vmem:[%s6] sm:$0xf]
    %v266 = vsel %vm143, %v161, 0
    %v269 = vsel %vm143, %v163, 0
    %vm271 = vcmask 1043456
    %v273 = vsel %vm271, %v264, 0
    %275 = vmatprep.subr.mxu0 0.0
    %276 = vmatpush1.msra.mxu0 0.0
    %277 = vmatprep.subr.mxu0 0.0
    %278 = vmatpush1.msra.mxu0 0.0
    %279 = vmatprep.subr.mxu0 0.0
    %280 = vmatpush1.msra.mxu0 0.0
    %281 = vmatprep.subr.mxu0 0.0
    %282 = vmatpush1.msra.mxu0 0.0
    %283 = vmatprep.subr.mxu0 0.0
    %284 = vmatpush1.msra.mxu0 0.0
    %285 = vmatprep.subr.mxu0 0.0
    %286 = vmatpush1.msra.mxu0 0.0
    %287 = vmatprep.subr.mxu0 0.0
    %288 = vmatpush1.msra.mxu0 0.0
    %289 = vmatprep.subr.mxu0 0.0
    %290 = vmatpush1.msra.mxu0 0.0
    %291 = vmatprep.subr.mxu0 0.0
    %292 = vmatpush1.msra.mxu0 0.0
    %293 = vmatprep.subr.mxu0 0.0
    %294 = vmatpush1.msra.mxu0 0.0
    %295 = vmatprep.subr.mxu0 0.0
    %296 = vmatpush1.msra.mxu0 0.0
    %297 = vmatprep.subr.mxu0 0.0
    %298 = vmatpush1.msra.mxu0 0.0
    %299 = vmatprep.subr.mxu0 0.0
    %300 = vmatpush1.msra.mxu0 0.0
    %301 = vmatprep.subr.mxu0 0.0
    %302 = vmatpush1.msra.mxu0 0.0
    %303 = vmatprep.subr.mxu0 0.0
    %304 = vmatpush1.msra.mxu0 0.0
    %305 = vmatprep.subr.mxu0 0.0
    %306 = vmatpush1.msra.mxu0 %v273
    %307 = vmatprep.subr.mxu0 0.0
    %308 = vmatpush2.msra.mxu0 0.0
    %309 = vmatprep.subr.mxu0 0.0
    %310 = vmatpush2.msra.mxu0 0.0
    %311 = vmatprep.subr.mxu0 0.0
    %312 = vmatpush2.msra.mxu0 0.0
    %313 = vmatprep.subr.mxu0 0.0
    %314 = vmatpush2.msra.mxu0 0.0
    %315 = vmatprep.subr.mxu0 0.0
    %316 = vmatpush2.msra.mxu0 0.0
    %317 = vmatprep.subr.mxu0 0.0
    %318 = vmatpush2.msra.mxu0 0.0
    %319 = vmatprep.subr.mxu0 0.0
    %320 = vmatpush2.msra.mxu0 0.0
    %321 = vmatprep.subr.mxu0 0.0
    %322 = vmatpush2.msra.mxu0 0.0
    %323 = vmatprep.subr.mxu0 0.0
    %324 = vmatpush2.msra.mxu0 0.0
    %325 = vmatprep.subr.mxu0 0.0
    %326 = vmatpush2.msra.mxu0 0.0
    %327 = vmatprep.subr.mxu0 0.0
    %328 = vmatpush2.msra.mxu0 0.0
    %329 = vmatprep.subr.mxu0 0.0
    %330 = vmatpush2.msra.mxu0 0.0
    %331 = vmatprep.subr.mxu0 0.0
    %332 = vmatpush2.msra.mxu0 0.0
    %333 = vmatprep.subr.mxu0 0.0
    %334 = vmatpush2.msra.mxu0 0.0
    %335 = vmatprep.subr.mxu0 0.0
    %336 = vmatpush2.msra.mxu0 0.0
    %337 = vmatprep.subr.mxu0 0.0
    %338 = vmatpush2.msra.mxu0 0.0
    %339 = vmatprep.mubr.f32.mxu0 0.0
    %340 = vmatmul.mubr.f32.gmra.mxu0 %v266
    %v341 = vpop.f32.mrf.mxu0
    %v342 = vadd.f32 0.0, %v341
    %v343 = vpop.f32.mrf.mxu0
    %344 = vmatprep.mubr.f32.mxu0 0.0
    %345 = vmatmul.mubr.f32.gmra.mxu0 %v269
    %v346 = vpop.f32.mrf.mxu0
    %v347 = vadd.f32 0.0, %v346
    %v348 = vpop.f32.mrf.mxu0
    %349 = vdwg.mxu0
    %v350 = vmul.f32 %v342, %v256
    %v351 = vmul.f32 %v347, %v261
    %v352 = vsel %vm61, %v350, 0.0
    %v353 = vrot.slane %v352, 4
    %v354 = vadd.f32 %v352, %v353
    %v355 = vrot.slane %v354, 2
    %v356 = vadd.f32 %v354, %v355
    %v357 = vrot.slane %v356, 1
    %v358 = vadd.f32 %v356, %v357
    %v359 = vsel %vm61, %v351, 0.0
    %v360 = vrot.slane %v359, 4
    %v361 = vadd.f32 %v359, %v360
    %v362 = vrot.slane %v361, 2
    %v363 = vadd.f32 %v361, %v362
    %v364 = vrot.slane %v363, 1
    %v365 = vadd.f32 %v363, %v364
    %v366 = vrcp.pop %v170
    %v367 = vrcp.pop %v177
    %vm370 = vcmask 1041409
    %v371 = vsel %vm370, %v367, %v366
    %v372 = vsel %vm143, %v371, 0
    %374 = vmatprep.subr.mxu0 0.0
    %375 = vmatpush1.msra.mxu0 0.0
    %376 = vmatprep.subr.mxu0 0.0
    %377 = vmatpush1.msra.mxu0 0.0
    %378 = vmatprep.subr.mxu0 0.0
    %379 = vmatpush1.msra.mxu0 0.0
    %380 = vmatprep.subr.mxu0 0.0
    %381 = vmatpush1.msra.mxu0 0.0
    %382 = vmatprep.subr.mxu0 0.0
    %383 = vmatpush1.msra.mxu0 0.0
    %384 = vmatprep.subr.mxu0 0.0
    %385 = vmatpush1.msra.mxu0 0.0
    %386 = vmatprep.subr.mxu0 0.0
    %387 = vmatpush1.msra.mxu0 0.0
    %388 = vmatprep.subr.mxu0 0.0
    %389 = vmatpush1.msra.mxu0 0.0
    %390 = vmatprep.subr.mxu0 0.0
    %391 = vmatpush1.msra.mxu0 0.0
    %392 = vmatprep.subr.mxu0 0.0
    %393 = vmatpush1.msra.mxu0 0.0
    %394 = vmatprep.subr.mxu0 0.0
    %395 = vmatpush1.msra.mxu0 0.0
    %396 = vmatprep.subr.mxu0 0.0
    %397 = vmatpush1.msra.mxu0 0.0
    %398 = vmatprep.subr.mxu0 0.0
    %399 = vmatpush1.msra.mxu0 0.0
    %400 = vmatprep.subr.mxu0 0.0
    %401 = vmatpush1.msra.mxu0 0.0
    %402 = vmatprep.subr.mxu0 0.0
    %403 = vmatpush1.msra.mxu0 0.0
    %404 = vmatprep.subr.mxu0 0.0
    %405 = vmatpush1.msra.mxu0 %v273
    %406 = vmatprep.subr.mxu0 0.0
    %407 = vmatpush2.msra.mxu0 0.0
    %408 = vmatprep.subr.mxu0 0.0
    %409 = vmatpush2.msra.mxu0 0.0
    %410 = vmatprep.subr.mxu0 0.0
    %411 = vmatpush2.msra.mxu0 0.0
    %412 = vmatprep.subr.mxu0 0.0
    %413 = vmatpush2.msra.mxu0 0.0
    %414 = vmatprep.subr.mxu0 0.0
    %415 = vmatpush2.msra.mxu0 0.0
    %416 = vmatprep.subr.mxu0 0.0
    %417 = vmatpush2.msra.mxu0 0.0
    %418 = vmatprep.subr.mxu0 0.0
    %419 = vmatpush2.msra.mxu0 0.0
    %420 = vmatprep.subr.mxu0 0.0
    %421 = vmatpush2.msra.mxu0 0.0
    %422 = vmatprep.subr.mxu0 0.0
    %423 = vmatpush2.msra.mxu0 0.0
    %424 = vmatprep.subr.mxu0 0.0
    %425 = vmatpush2.msra.mxu0 0.0
    %426 = vmatprep.subr.mxu0 0.0
    %427 = vmatpush2.msra.mxu0 0.0
    %428 = vmatprep.subr.mxu0 0.0
    %429 = vmatpush2.msra.mxu0 0.0
    %430 = vmatprep.subr.mxu0 0.0
    %431 = vmatpush2.msra.mxu0 0.0
    %432 = vmatprep.subr.mxu0 0.0
    %433 = vmatpush2.msra.mxu0 0.0
    %434 = vmatprep.subr.mxu0 0.0
    %435 = vmatpush2.msra.mxu0 0.0
    %436 = vmatprep.subr.mxu0 0.0
    %437 = vmatpush2.msra.mxu0 0.0
    %438 = vmatprep.mubr.f32.mxu0 0.0
    %439 = vmatmul.mubr.f32.gmra.mxu0 %v372
    %v440 = vpop.f32.mrf.mxu0
    %v441 = vadd.f32 0.0, %v440
    %v442 = vpop.f32.mrf.mxu0
    %443 = vdwg.mxu0
    %v445 = vrot.slane %v441, 1
    %v448 = vmul.f32 %v358, %v441
    %v449 = vmul.f32 %v365, %v445
    %v450 = vld [vmem:[#allocation5] sm:$0xff]
    %v451 = vld [vmem:[#allocation5 + $0x8] sm:$0xff]
    %v452 = vld [vmem:[#allocation5 + $0x10] sm:$0xff]
    %v453 = vld [vmem:[#allocation5 + $0x18] sm:$0xff]
    %v454 = vld [vmem:[%s5] sm:$0x1]
    %v456 = vlaneseq
    %v457 = vshrl.u32 %v456, 7
    %v458 = vsub.s32 0, %v457
    %v459 = vrot.slane %v454, %v458
    %v463 = vrot.slane %v449, 7
    %v464 = vsel %vm370, %v463, %v448
    %v465 = vsel %vm61, %v464, 0
    %467 = vmatprep.subr.mxu0 0.0
    %468 = vmatpush1.msra.mxu0 0.0
    %469 = vmatprep.subr.mxu0 0.0
    %470 = vmatpush1.msra.mxu0 0.0
    %471 = vmatprep.subr.mxu0 0.0
    %472 = vmatpush1.msra.mxu0 0.0
    %473 = vmatprep.subr.mxu0 0.0
    %474 = vmatpush1.msra.mxu0 0.0
    %475 = vmatprep.subr.mxu0 0.0
    %476 = vmatpush1.msra.mxu0 0.0
    %477 = vmatprep.subr.mxu0 0.0
    %478 = vmatpush1.msra.mxu0 0.0
    %479 = vmatprep.subr.mxu0 0.0
    %480 = vmatpush1.msra.mxu0 0.0
    %481 = vmatprep.subr.mxu0 0.0
    %482 = vmatpush1.msra.mxu0 0.0
    %483 = vmatprep.subr.mxu0 0.0
    %484 = vmatpush1.msra.mxu0 0.0
    %485 = vmatprep.subr.mxu0 0.0
    %486 = vmatpush1.msra.mxu0 0.0
    %487 = vmatprep.subr.mxu0 0.0
    %488 = vmatpush1.msra.mxu0 0.0
    %489 = vmatprep.subr.mxu0 0.0
    %490 = vmatpush1.msra.mxu0 0.0
    %491 = vmatprep.subr.mxu0 0.0
    %492 = vmatpush1.msra.mxu0 %v453
    %493 = vmatprep.subr.mxu0 0.0
    %494 = vmatpush1.msra.mxu0 %v452
    %495 = vmatprep.subr.mxu0 0.0
    %496 = vmatpush1.msra.mxu0 %v451
    %497 = vmatprep.subr.mxu0 0.0
    %498 = vmatpush1.msra.mxu0 %v450
    %499 = vmatprep.subr.mxu0 0.0
    %500 = vmatpush2.msra.mxu0 0.0
    %501 = vmatprep.subr.mxu0 0.0
    %502 = vmatpush2.msra.mxu0 0.0
    %503 = vmatprep.subr.mxu0 0.0
    %504 = vmatpush2.msra.mxu0 0.0
    %505 = vmatprep.subr.mxu0 0.0
    %506 = vmatpush2.msra.mxu0 0.0
    %507 = vmatprep.subr.mxu0 0.0
    %508 = vmatpush2.msra.mxu0 0.0
    %509 = vmatprep.subr.mxu0 0.0
    %510 = vmatpush2.msra.mxu0 0.0
    %511 = vmatprep.subr.mxu0 0.0
    %512 = vmatpush2.msra.mxu0 0.0
    %513 = vmatprep.subr.mxu0 0.0
    %514 = vmatpush2.msra.mxu0 0.0
    %515 = vmatprep.subr.mxu0 0.0
    %516 = vmatpush2.msra.mxu0 0.0
    %517 = vmatprep.subr.mxu0 0.0
    %518 = vmatpush2.msra.mxu0 0.0
    %519 = vmatprep.subr.mxu0 0.0
    %520 = vmatpush2.msra.mxu0 0.0
    %521 = vmatprep.subr.mxu0 0.0
    %522 = vmatpush2.msra.mxu0 0.0
    %523 = vmatprep.subr.mxu0 0.0
    %524 = vmatpush2.msra.mxu0 0.0
    %525 = vmatprep.subr.mxu0 0.0
    %526 = vmatpush2.msra.mxu0 0.0
    %527 = vmatprep.subr.mxu0 0.0
    %528 = vmatpush2.msra.mxu0 0.0
    %529 = vmatprep.subr.mxu0 0.0
    %530 = vmatpush2.msra.mxu0 0.0
    %531 = vmatprep.mubr.f32.mxu0 0.0
    %532 = vmatmul.mubr.f32.gmra.mxu0 %v465
    %v533 = vpop.f32.mrf.mxu0
    %v534 = vadd.f32 %v459, %v533
    %v535 = vpop.f32.mrf.mxu0
    %536 = vdwg.mxu0
    %vm537 = vcmask 254976
    %538 = vst.msk [vmem:[#allocation7] sm:$0x3] %vm537, %v534
    // Predicated region
    $region38: #{tpu_custom_call.1} parent=1 // pred_check
      _
    $region39: #{tpu_custom_call.1} parent=1 // pred_check_branch
      %540 = sbr.rel (0) target = $region41
    $region40: #{tpu_custom_call.1} parent=1 // pred_region
      %s542 = ssub.s32 32, 32
      %543 = vsyncadd [#allocation4], %s542
      %s545 = sshll.u32 [#allocation7], 4
      %s546 = int_to_ptr.vmem [resolvable:$true] %s545
      %548 = dma.vmem_to_hbm [thread:$0]  %s546, 32, %s7, [#allocation4]
    $region41: #{tpu_custom_call.1} parent=1 // pred_fallthru
      _
    // Predicated region
    $region42: #{tpu_custom_call.1} parent=1 // pred_check
      _
    $region43: #{tpu_custom_call.1} parent=1 // pred_check_branch
      %550 = sbr.rel (0) target = $region45
    $region44: #{tpu_custom_call.1} parent=1 // pred_region
      %551 = dma.done [#allocation4], 32
    $region45: #{tpu_custom_call.1} parent=1 // pred_fallthru
      _
    %552 = vsyncpa [#allocation3], 1
    %553 = vsyncpa [#allocation6], 1
    %554 = vsyncpa [#allocation4], 1

</llo_original>
